<compile_context>
chip_gen: v5e
topology: v5e:2x2
jax: 0.10.0
libtpu: 0.0.40
codegen_flags: <defaults>
</compile_context>

<pallas_src>
import jax
import jax.numpy as jnp
from jax import lax
from jax.experimental import pallas as pl
from jax.experimental.pallas import tpu as pltpu

_EPS = 1e-12  # matches torch.nn.functional.normalize default eps


# ----------------------------------------------------------------------------
# row-wise L2 normalization (reduction in f32, scaling in the native dtype)
# ----------------------------------------------------------------------------
def _normalize_rows(tile):
    """x / max(||x||, eps) == x * rsqrt(max(||x||^2, eps^2)), row-wise."""
    x32 = tile.astype(jnp.float32)                       # no-op for f32 tiles
    ssq = jnp.sum(x32 * x32, axis=-1, keepdims=True)     # XLU reduce, f32
    scale = lax.rsqrt(jnp.maximum(ssq, _EPS * _EPS))     # EUP slot
    if tile.dtype == jnp.float32:
        return tile * scale
    # Low-precision queue: keep the tile in its native dtype (no full f32
    # materialization); only the reduction above ran in f32.
    return tile * scale.astype(tile.dtype)


# ----------------------------------------------------------------------------
# kernel
# ----------------------------------------------------------------------------
def _make_kernel(bs_pad, shift, tile_rows, normalize_tile):
    body_rows = tile_rows - bs_pad

    def kernel(top_ref, q_ref, out_ref):
        # top_ref : (1, bs_pad, C) rows landing at the top of this out block
        #           (x [+ pad rows] for block 0, prev old block tail [+ pad]
        #            for blocks j >= 1) -- built wrapper-side.
        # q_ref   : (tile_rows, C) old queue block j (identity-mapped alias).
        # out_ref : (tile_rows, C) new queue block j.
        top = top_ref[0]
        body = q_ref[pl.ds(shift, body_rows), :]
        if normalize_tile:
            top = _normalize_rows(top)
            body = _normalize_rows(body)
        # Two sublane-aligned, lane-dense, full-width stores (no concat, no
        # masked vst): bs_pad and tile_rows are multiples of the packed
        # sublane height whenever the wrapper could arrange it.
        out_ref[pl.ds(0, bs_pad), :] = top.astype(out_ref.dtype)
        out_ref[pl.ds(bs_pad, body_rows), :] = body.astype(out_ref.dtype)

    return kernel


# ----------------------------------------------------------------------------
# block-size selection
# ----------------------------------------------------------------------------
def _pick_tile_rows(n_rows, n_feat, bs_pad, itemsize, sub,
                    target_block_bytes=8 << 20):
    """Pick a row-tile: multiple of `sub`, > bs_pad, ~target_block_bytes,
    exact divisor of n_rows if possible, and >= 2 grid steps when possible."""
    row_bytes = max(1, n_feat * itemsize)
    cap = (target_block_bytes // row_bytes) // sub * sub
    min_tm = bs_pad + sub
    cap = max(cap, min_tm)
    if n_rows <= min_tm:
        return n_rows                       # degenerate tiny queue: one block
    hi = min(cap, (n_rows // sub) * sub)
    if n_rows // 2 >= min_tm:               # keep >=2 grid steps when possible
        hi = min(hi, (n_rows // 2) // sub * sub)
    hi = max(hi, min_tm)
    for tm in range(hi, min_tm - 1, -sub):
        if n_rows % tm == 0:
            return tm                       # exact divisor: no ragged block
    return hi                               # ragged last block via cdiv grid


# ----------------------------------------------------------------------------
# wrapper
# ----------------------------------------------------------------------------
def buffer_queue_forward(x, queue, *, l2norm=True, renorm_old=True,
                         block_rows=None, target_block_bytes=8 << 20):
    """Functional BufferQueue.forward: returns the updated queue.

    The queue argument is aliased/donated (updated in place); do not reuse
    the input queue array after this call.
    """
    bs, C = x.shape
    N, Cq = queue.shape
    assert C == Cq, "x and queue feature dims must match"
    assert 0 < bs < N, "batch size must be smaller than the queue"

    qdtype = queue.dtype
    itemsize = jnp.dtype(qdtype).itemsize
    sub = max(8, 32 // itemsize)            # packed sublane height: 8/16/32
    bs_pad = ((bs + sub - 1) // sub) * sub  # aligned top-store height
    if bs_pad >= N:                         # tiny-queue degenerate case
        bs_pad = bs
    shift = bs_pad - bs                     # pad rows come from old[..] below x

    if block_rows is not None:
        tm = int(block_rows)
    else:
        tm = _pick_tile_rows(N, C, bs_pad, itemsize, sub, target_block_bytes)
    tm = min(tm, N)
    assert tm > bs_pad, "row tile must exceed the (padded) batch size"
    assert tm == N or tm % 8 == 0, "row tile must be a multiple of 8"
    nb = (N + tm - 1) // tm                 # ragged last block allowed

    # ---- boundary rows (tiny (nb, bs_pad, C) side input) -------------------
    #   boundary[0]      = [x (cast to queue dtype), old[0 : shift]]
    #   boundary[j >= 1] = old[j*tm - bs : j*tm - bs + bs_pad]
    x_rows = x
    if l2norm and not renorm_old:
        # Only new rows need normalizing; old rows stay unit-norm (opt-in,
        # not bit-exact with torch after low-precision round-trips).
        x_rows = _normalize_rows(x_rows.astype(jnp.float32))
    x_rows = x_rows.astype(qdtype)
    top0 = x_rows if shift == 0 else jnp.concatenate(
        [x_rows, queue[:shift]], axis=0)
    top0 = top0[None]                                             # (1,bs_pad,C)
    if nb > 1:
        starts = jnp.arange(1, nb, dtype=jnp.int32) * tm - bs
        row_idx = starts[:, None] + jnp.arange(bs_pad, dtype=jnp.int32)[None, :]
        row_idx = jnp.minimum(row_idx, N - 1)   # only rows whose outputs are
        #                                         OOB in a ragged block clamp
        tails = jnp.take(queue, row_idx.reshape(-1), axis=0)
        boundary = jnp.concatenate(
            [top0, tails.reshape(nb - 1, bs_pad, C)], axis=0)     # (nb,bs_pad,C)
    else:
        boundary = top0

    kernel = _make_kernel(bs_pad, shift, tm, l2norm and renorm_old)

    # VMEM budget: double-buffered in + out blocks, boundary, temporaries.
    block_bytes = tm * C * itemsize
    top_bytes = bs_pad * C * itemsize
    vmem_limit = int(min(96 << 20,
                         max(32 << 20,
                             6 * block_bytes + 4 * top_bytes + (2 << 20))))

    do_norm = l2norm and renorm_old
    cost = pl.CostEstimate(
        flops=3 * N * C if do_norm else 0,
        transcendentals=N if do_norm else 0,
        bytes_accessed=2 * N * C * itemsize + 2 * nb * bs_pad * C * itemsize)

    return pl.pallas_call(
        kernel,
        out_shape=jax.ShapeDtypeStruct((N, C), qdtype),
        grid=(nb,),
        in_specs=[
            pl.BlockSpec((1, bs_pad, C), lambda j: (j, 0, 0)),  # boundary rows
            pl.BlockSpec((tm, C), lambda j: (j, 0)),            # old queue blk
        ],
        out_specs=pl.BlockSpec((tm, C), lambda j: (j, 0)),      # new queue blk
        # Queue blocks are identity-mapped and each grid step only reads and
        # writes its own rows, so in-place aliasing is hazard-free and the row
        # axis may run in parallel (2 TCs on v7x; no-op on v5e/v6e).
        input_output_aliases={1: 0},
        compiler_params=pltpu.CompilerParams(
            dimension_semantics=("parallel",),
            vmem_limit_bytes=vmem_limit,
        ),
        cost_estimate=cost,
    )(boundary, queue)


# ----------------------------------------------------------------------------
# init + pure-JAX reference (for validation)
# ----------------------------------------------------------------------------
def init_buffer_queue(key, num_features, queue_size, l2norm=True,
                      dtype=jnp.float32):
    """Deterministic stand-in for torch.rand(N, C) (+ optional normalize)."""
    q = jax.random.uniform(key, (queue_size, num_features), dtype=jnp.float32)
    if l2norm:
        q = q / jnp.maximum(jnp.linalg.norm(q, axis=1, keepdims=True), _EPS)
    return q.astype(dtype)


def _ref_forward(x, queue, l2norm=True):
    """Pure-JAX reference of BufferQueue.forward."""
    bs = x.shape[0]
    N = queue.shape[0]
    q = jnp.concatenate(
        [x.astype(jnp.float32), queue[: N - bs].astype(jnp.float32)], axis=0)
    if l2norm:
        nrm = jnp.sqrt(jnp.sum(q * q, axis=1, keepdims=True))
        q = q / jnp.maximum(nrm, _EPS)
    return q.astype(queue.dtype)


if __name__ == "__main__":
    root = jax.random.PRNGKey(0)

    def run_case(key, N, C, bs, block_rows=None, l2norm=True,
                 dtype=jnp.float32, tol=1e-5):
        kq, kx = jax.random.split(key)
        q0 = init_buffer_queue(kq, C, N, l2norm=l2norm, dtype=dtype)
        x = jax.random.normal(kx, (bs, C), dtype=jnp.float32).astype(dtype)
        ref = _ref_forward(x, q0, l2norm=l2norm)     # before q0 is donated
        out = buffer_queue_forward(x, q0, l2norm=l2norm, block_rows=block_rows)
        out = jax.block_until_ready(out)
        assert out.shape == (N, C) and out.dtype == dtype
        assert jnp.allclose(out.astype(jnp.float32), ref.astype(jnp.float32),
                            atol=tol, rtol=tol), (N, C, bs, block_rows, dtype)

    keys = jax.random.split(root, 6)
    # Auto tiling, sublane-aligned batch: two aligned stores, zero shift.
    run_case(keys[0], N=512, C=128, bs=8)
    # Sublane-misaligned batch: padded boundary, shifted body read, aligned
    # stores.
    run_case(keys[1], N=512, C=128, bs=2)
    # Small queue: auto tiling still keeps two grid steps.
    run_case(keys[2], N=64, C=128, bs=2)
    # l2norm disabled: pure shift + insert copy (no casts, no normalize).
    run_case(keys[3], N=128, C=128, bs=8, block_rows=64, l2norm=False)
    # Ragged last block (N % block_rows != 0) via the cdiv grid.
    run_case(keys[4], N=160, C=128, bs=8, block_rows=48)
    # bf16 queue: 16-row packed-sublane granularity, native-dtype scaling.
    run_case(keys[5], N=256, C=128, bs=16, dtype=jnp.bfloat16, tol=2e-2)

    print("KERNEL_OK")
</pallas_src>

<mosaic_0001>
module attributes {stable_mosaic.version = 11 : i64} {
  func.func @kernel(%arg0: i32, %arg1: memref<1x8x128xf32, #tpu.memory_space<vmem>>, %arg2: memref<256x128xf32, #tpu.memory_space<vmem>>, %arg3: memref<256x128xf32, #tpu.memory_space<vmem>>) attributes {dimension_semantics = [#tpu.dimension_semantics<parallel>], iteration_bounds = array<i64: 2>, scalar_prefetch = 0 : i64, scratch_operands = 0 : i64, tpu.core_type = #tpu.core_type<tc>, window_params = [{transform_indices = @transform_0, window_bounds = array<i64: 1, 8, 128>}, {transform_indices = @transform_1, window_bounds = array<i64: 256, 128>}, {transform_indices = @transform_2, window_bounds = array<i64: 256, 128>}]} {
    %c0 = arith.constant 0 : index
    %c0_0 = arith.constant 0 : index
    %c0_1 = arith.constant 0 : index
    %0 = vector.load %arg1[%c0, %c0_0, %c0_1] : memref<1x8x128xf32, #tpu.memory_space<vmem>>, vector<1x8x128xf32>
    %1 = vector.shape_cast %0 : vector<1x8x128xf32> to vector<8x128xf32>
    %c0_2 = arith.constant 0 : index
    %c0_3 = arith.constant 0 : index
    %2 = vector.load %arg2[%c0_2, %c0_3] : memref<256x128xf32, #tpu.memory_space<vmem>>, vector<248x128xf32>
    %3 = arith.mulf %1, %1 : vector<8x128xf32>
    %cst = arith.constant dense<0.000000e+00> : vector<8xf32>
    %4 = vector.multi_reduction <add>, %3, %cst [1] : vector<8x128xf32> to vector<8xf32>
    %5 = vector.shape_cast %4 : vector<8xf32> to vector<8x1xf32>
    %cst_4 = arith.constant 1.000000e-24 : f32
    %6 = vector.broadcast %cst_4 : f32 to vector<8x1xf32>
    %7 = arith.maximumf %5, %6 : vector<8x1xf32>
    %8 = math.rsqrt %7 : vector<8x1xf32>
    %9 = vector.broadcast %8 : vector<8x1xf32> to vector<8x128xf32>
    %10 = arith.mulf %1, %9 : vector<8x128xf32>
    %11 = arith.mulf %2, %2 : vector<248x128xf32>
    %cst_5 = arith.constant dense<0.000000e+00> : vector<248xf32>
    %12 = vector.multi_reduction <add>, %11, %cst_5 [1] : vector<248x128xf32> to vector<248xf32>
    %13 = vector.shape_cast %12 : vector<248xf32> to vector<248x1xf32>
    %cst_6 = arith.constant 1.000000e-24 : f32
    %14 = vector.broadcast %cst_6 : f32 to vector<248x1xf32>
    %15 = arith.maximumf %13, %14 : vector<248x1xf32>
    %16 = math.rsqrt %15 : vector<248x1xf32>
    %17 = vector.broadcast %16 : vector<248x1xf32> to vector<248x128xf32>
    %18 = arith.mulf %2, %17 : vector<248x128xf32>
    %c0_7 = arith.constant 0 : index
    %c0_8 = arith.constant 0 : index
    %19 = vector.load %arg3[%c0_7, %c0_8] : memref<256x128xf32, #tpu.memory_space<vmem>>, vector<8x128xf32>
    tpu.vector_store %arg3[%c0_7, %c0_8], %10 {strides = array<i32>} : memref<256x128xf32, #tpu.memory_space<vmem>>, vector<8x128xf32>,
    %c8 = arith.constant 8 : index
    %c0_9 = arith.constant 0 : index
    %20 = vector.load %arg3[%c8, %c0_9] : memref<256x128xf32, #tpu.memory_space<vmem>>, vector<248x128xf32>
    tpu.vector_store %arg3[%c8, %c0_9], %18 {strides = array<i32>} : memref<256x128xf32, #tpu.memory_space<vmem>>, vector<248x128xf32>,
    return
  }
  func.func @transform_0(%arg0: i32) -> (i32, i32, i32) {
    %c0_i32 = arith.constant 0 : i32
    %c0_i32_0 = arith.constant 0 : i32
    %c0_i32_1 = arith.constant 0 : i32
    return %arg0, %c0_i32, %c0_i32_0 : i32, i32, i32
  }
  func.func @transform_1(%arg0: i32) -> (i32, i32) {
    %c0_i32 = arith.constant 0 : i32
    %c0_i32_0 = arith.constant 0 : i32
    return %arg0, %c0_i32 : i32, i32
  }
  func.func @transform_2(%arg0: i32) -> (i32, i32) {
    %c0_i32 = arith.constant 0 : i32
    %c0_i32_0 = arith.constant 0 : i32
    return %arg0, %c0_i32 : i32, i32
  }
}

</mosaic_0001>

<llo_original>
// kernel: tpu_custom_call.1
$region0: #{tpu_custom_call.1}
  #allocation0 [shape = 'u32[]', space=smem, size = 0x4, offset = 0x4, fixed_abs, tag = 'smem constant byte address 0x4 - core index']
  #allocation1 [shape = 'u32[72,128]{1,0:T(1,128)}', space=vmem, size = 0x9000, scoped, tag = 'internal scratch']
  %s0 = inlined_call_operand.vmem [shape: f32[2,8,128], index: 0, kind: input, shape index: {}]
  %s1 = inlined_call_operand.hbm [shape: f32[512,128], index: 1, kind: input, shape index: {}, may-alias: {1,2}]
  %s2 = inlined_call_operand.hbm [shape: f32[512,128], index: 2, kind: output, shape index: {}, may-alias: {1,2}]
  %s3 = sld [smem:[#allocation0]]
  $region45: #{tpu_custom_call.1} parent=0
    _
  %s5 = ssub.s32 1, %s3
  %s6 = scalar_select 0, %s5, %s3
  $region1: #{tpu_custom_call.1} parent=0
    #allocation2 [shape = 'u8[262144]{0}', space=vmem, size = 0x40000, scoped, tag = 'input window, operand 1']
    #allocation3 [shape = 's32[2]{0}', space=sflag, size = 0x8, scoped, tag = 'scoped memory for tpu_custom_call.1']
    #allocation4 [shape = 's32[2]{0}', space=sflag, size = 0x8, scoped, tag = 'scoped memory for tpu_custom_call.1']
    #allocation5 [shape = 'u8[262144]{0}', space=vmem, size = 0x40000, scoped, tag = 'output window, operand 0']
    %7 = vsyncpa [#allocation3], 0
    %s8 = scalar_lea.sflag [#allocation3], 1
    %9 = vsyncpa %s8, 0
    %10 = vsyncpa [#allocation4], 0
    %s11 = scalar_lea.sflag [#allocation4], 1
    %12 = vsyncpa %s11, 0
    loop: start=0, step=1, limit=4
    $region2: #{tpu_custom_call.1} parent=1 // loop_pre_header
      _
    $region3: #{tpu_custom_call.1} parent=1 // loop_header
      %s14 = sphi 0, %s18
      %p15 = scmp.ge.s32.totalorder %s14, 4
      %s24 = sphi 0, %s26
      %s27 = sphi 0, %s24
      %s28 = sphi 0, %s27
      %s44 = sphi 0, %s28
      %s50 = sphi 0, %s52
      %s53 = sphi 0, %s50
      %s54 = sphi 0, %s53
      %s70 = sphi 0, %s54
      %s76 = sphi 0, %s78
      %s79 = sphi 0, %s76
      %s80 = sphi 0, %s79
      %s96 = sphi 0, %s80
    $region4: #{tpu_custom_call.1} parent=1 // loop_header_branch
      %17 = sbr.rel (%p15) target = $region8
    $region5: #{tpu_custom_call.1} parent=1 // loop_body
      %s19 = ssub.s32 %s14, 1
      %s20 = ssub.s32 %s14, 2
      %s21 = sadd.s32 %s14, 1
      %s22 = ssub.s32 %s14, %s21
      %p23 = scmp.eq.s32.totalorder %s22, 0
      %s25 = sadd.s32 %s24, 1
      %s26 = scalar_select %p23, %s24, %s25
      %p29 = pneg %p23
      %p30 = scmp.eq.s32.totalorder %s14, 1
      %p31 = por %p29, %p30
      %p32 = scmp.ne.s32.totalorder %s24, %s27
      %p33 = scmp.eq.s32.totalorder %s14, 0
      %p34 = por %p32, %p33
      %p35 = scmp.ne.s32.totalorder %s24, %s27
      %p36 = scmp.eq.s32.totalorder %s19, 1
      %p37 = por %p35, %p36
      %p38 = scmp.ne.s32.totalorder %s27, %s28
      %p39 = scmp.eq.s32.totalorder %s19, 0
      %p40 = por %p38, %p39
      %p41 = scmp.ne.s32.totalorder %s27, %s28
      %p42 = scmp.eq.s32.totalorder %s20, 1
      %p43 = por %p41, %p42
      %p45 = scmp.ne.s32.totalorder %s28, %s44
      %p46 = scmp.eq.s32.totalorder %s20, 0
      %p47 = por %p45, %p46
      %s48 = ssub.s32 %s14, %s21
      %p49 = scmp.eq.s32.totalorder %s48, 0
      %s51 = sadd.s32 %s50, 1
      %s52 = scalar_select %p49, %s50, %s51
      %p55 = pneg %p49
      %p56 = scmp.eq.s32.totalorder %s14, 1
      %p57 = por %p55, %p56
      %p58 = scmp.ne.s32.totalorder %s50, %s53
      %p59 = scmp.eq.s32.totalorder %s14, 0
      %p60 = por %p58, %p59
      %p61 = scmp.ne.s32.totalorder %s50, %s53
      %p62 = scmp.eq.s32.totalorder %s19, 1
      %p63 = por %p61, %p62
      %p64 = scmp.ne.s32.totalorder %s53, %s54
      %p65 = scmp.eq.s32.totalorder %s19, 0
      %p66 = por %p64, %p65
      %p67 = scmp.ne.s32.totalorder %s53, %s54
      %p68 = scmp.eq.s32.totalorder %s20, 1
      %p69 = por %p67, %p68
      %p71 = scmp.ne.s32.totalorder %s54, %s70
      %p72 = scmp.eq.s32.totalorder %s20, 0
      %p73 = por %p71, %p72
      %s74 = ssub.s32 %s14, %s21
      %p75 = scmp.eq.s32.totalorder %s74, 0
      %s77 = sadd.s32 %s76, 1
      %s78 = scalar_select %p75, %s76, %s77
      %p81 = pneg %p75
      %p82 = scmp.eq.s32.totalorder %s14, 1
      %p83 = por %p81, %p82
      %p84 = scmp.ne.s32.totalorder %s76, %s79
      %p85 = scmp.eq.s32.totalorder %s14, 0
      %p86 = por %p84, %p85
      %p87 = scmp.ne.s32.totalorder %s76, %s79
      %p88 = scmp.eq.s32.totalorder %s19, 1
      %p89 = por %p87, %p88
      %p90 = scmp.ne.s32.totalorder %s79, %s80
      %p91 = scmp.eq.s32.totalorder %s19, 0
      %p92 = por %p90, %p91
      %p93 = scmp.ne.s32.totalorder %s79, %s80
      %p94 = scmp.eq.s32.totalorder %s20, 1
      %p95 = por %p93, %p94
      %p97 = scmp.ne.s32.totalorder %s80, %s96
      %p98 = scmp.eq.s32.totalorder %s20, 0
      %p99 = por %p97, %p98
      %p100 = scmp.le.s32.totalorder 1, %s14
      %p101 = scmp.lt.s32.totalorder %s14, 3
      %p102 = pnand %p100, %p101
      %p103 = pneg %p102
      // Predicated region
      $region9: #{tpu_custom_call.1} parent=5 // pred_check
        _
      $region10: #{tpu_custom_call.1} parent=5 // pred_check_branch
        %105 = sbr.rel (%p102) target = $region12
      $region11: #{tpu_custom_call.1} parent=5 // pred_region
        %s106 = ssub.s32 %s14, 1
      $region12: #{tpu_custom_call.1} parent=5 // pred_fallthru
        _
      %p107 = scmp.lt.s32.totalorder %s14, 2
      // Predicated region
      $region13: #{tpu_custom_call.1} parent=5 // pred_check
        %p108 = pneg %p107
      $region14: #{tpu_custom_call.1} parent=5 // pred_check_branch
        %110 = sbr.rel (%p108) target = $region16
      $region15: #{tpu_custom_call.1} parent=5 // pred_region
        // Predicated region
        $region17: #{tpu_custom_call.1} parent=15 // pred_check
          %p111 = pneg %p34
        $region18: #{tpu_custom_call.1} parent=15 // pred_check_branch
          %113 = sbr.rel (%p111) target = $region20
        $region19: #{tpu_custom_call.1} parent=15 // pred_region
          %p114 = scmp.lt.s32.totalorder %s14, 1
          %s115 = scalar_select %p114, %s14, 1
          %s116 = smul.addr %s115, 8
          %s117 = scalar_lea.vmem %s0, %s116
        $region20: #{tpu_custom_call.1} parent=15 // pred_fallthru
          _
        // Predicated region
        $region21: #{tpu_custom_call.1} parent=15 // pred_check
          %p118 = pneg %p60
        $region22: #{tpu_custom_call.1} parent=15 // pred_check_branch
          %120 = sbr.rel (%p118) target = $region24
        $region23: #{tpu_custom_call.1} parent=15 // pred_region
          %s121 = sand.u32 %s50, 1
          %s122 = scalar_lea.sflag [#allocation3], %s121
          %s123 = sand.u32 %s50, 1
          %s124 = smul.addr %s123, 256
          %s125 = scalar_lea.vmem [#allocation2], %s124
          %s126 = smul.u32 32, %s14
          %128 = vsyncadd %s122, 0
          %s129 = smul.addr %s126, 8
          %s130 = scalar_lea.hbm %s1, %s129
          %s131 = sshll.u32 %s130, 4
          %s132 = int_to_ptr.hbm [resolvable:$true] %s131
          %s133 = sshll.u32 %s125, 4
          %s134 = int_to_ptr.vmem [resolvable:$true] %s133
          %139 = dma.hbm_to_vmem [thread:$0]  %s132, 4096, %s134, %s122, 128, 128, 8
        $region24: #{tpu_custom_call.1} parent=15 // pred_fallthru
          _
      $region16: #{tpu_custom_call.1} parent=5 // pred_fallthru
        _
      %p140 = scmp.le.s32.totalorder 1, %s14
      %p141 = scmp.lt.s32.totalorder %s14, 3
      %p142 = pnand %p140, %p141
      %p143 = pneg %p142
      // Predicated region
      $region25: #{tpu_custom_call.1} parent=5 // pred_check
        _
      $region26: #{tpu_custom_call.1} parent=5 // pred_check_branch
        %145 = sbr.rel (%p142) target = $region28
      $region27: #{tpu_custom_call.1} parent=5 // pred_region
        %s146 = ssub.s32 %s14, 1
        %s147 = sand.u32 %s53, 1
        %s148 = scalar_lea.sflag [#allocation3], %s147
        %s149 = sand.u32 %s53, 1
        %s150 = smul.addr %s149, 256
        %s151 = scalar_lea.vmem [#allocation2], %s150
        // Predicated region
        $region29: #{tpu_custom_call.1} parent=27 // pred_check
          %p152 = pneg %p66
        $region30: #{tpu_custom_call.1} parent=27 // pred_check_branch
          %154 = sbr.rel (%p152) target = $region32
        $region31: #{tpu_custom_call.1} parent=27 // pred_region
          %156 = dma.done %s148, 4096
        $region32: #{tpu_custom_call.1} parent=27 // pred_fallthru
          _
        %p157 = scmp.lt.s32.totalorder %s19, 1
        %s158 = scalar_select %p157, %s19, 1
        %s159 = smul.addr %s158, 8
        %s160 = scalar_lea.vmem %s0, %s159
        %p161 = pneg %p40
        %p162 = pneg %p37
        %s163 = sand.u32 %s53, 1
        %s164 = scalar_lea.sflag [#allocation3], %s163
        %s165 = sand.u32 %s53, 1
        %s166 = smul.addr %s165, 256
        %s167 = scalar_lea.vmem [#allocation2], %s166
        %p168 = pneg %p66
        %p169 = pneg %p63
        %p170 = pneg %p92
        %p171 = pneg %p89
        %s172 = sand.u32 %s79, 1
        %s173 = scalar_lea.sflag [#allocation4], %s172
        %s174 = sand.u32 %s79, 1
        %s175 = smul.addr %s174, 256
        %s176 = scalar_lea.vmem [#allocation5], %s175
        %p177 = scmp.lt.s32.totalorder %s19, 1
        %s178 = scalar_select %p177, %s19, 1
        %s179 = smul.addr %s178, 8
        %s180 = scalar_lea.vmem %s0, %s179
        %s181 = smul.u32 32, %s19
        %s182 = smul.u32 32, %s19
        %v183 = vld [vmem:[%s180] sm:$0xff]
        %v184 = vld [vmem:[%s151] sm:$0xff]
        %v185 = vld [vmem:[%s151 + $0x8] sm:$0xff]
        %v186 = vld [vmem:[%s151 + $0x10] sm:$0xff]
        %v187 = vld [vmem:[%s151 + $0x18] sm:$0xff]
        %v188 = vld [vmem:[%s151 + $0x20] sm:$0xff]
        %v189 = vld [vmem:[%s151 + $0x28] sm:$0xff]
        %v190 = vld [vmem:[%s151 + $0x30] sm:$0xff]
        %v191 = vld [vmem:[%s151 + $0x38] sm:$0xff]
        %v192 = vld [vmem:[%s151 + $0x40] sm:$0xff]
        %v193 = vld [vmem:[%s151 + $0x48] sm:$0xff]
        %v194 = vld [vmem:[%s151 + $0x50] sm:$0xff]
        %v195 = vld [vmem:[%s151 + $0x58] sm:$0xff]
        %v196 = vld [vmem:[%s151 + $0x60] sm:$0xff]
        %v197 = vld [vmem:[%s151 + $0x68] sm:$0xff]
        %v198 = vld [vmem:[%s151 + $0x70] sm:$0xff]
        %v199 = vld [vmem:[%s151 + $0x78] sm:$0xff]
        %v200 = vld [vmem:[%s151 + $0x80] sm:$0xff]
        %v201 = vld [vmem:[%s151 + $0x88] sm:$0xff]
        %v202 = vld [vmem:[%s151 + $0x90] sm:$0xff]
        %v203 = vld [vmem:[%s151 + $0x98] sm:$0xff]
        %v204 = vld [vmem:[%s151 + $0xa0] sm:$0xff]
        %v205 = vld [vmem:[%s151 + $0xa8] sm:$0xff]
        %v206 = vld [vmem:[%s151 + $0xb0] sm:$0xff]
        %v207 = vld [vmem:[%s151 + $0xb8] sm:$0xff]
        %v208 = vld [vmem:[%s151 + $0xc0] sm:$0xff]
        %v209 = vld [vmem:[%s151 + $0xc8] sm:$0xff]
        %v210 = vld [vmem:[%s151 + $0xd0] sm:$0xff]
        %v211 = vld [vmem:[%s151 + $0xd8] sm:$0xff]
        %v212 = vld [vmem:[%s151 + $0xe0] sm:$0xff]
        %v213 = vld [vmem:[%s151 + $0xe8] sm:$0xff]
        %v214 = vld [vmem:[%s151 + $0xf0] sm:$0xff]
        %v215 = vmul.f32 %v183, %v183
        %216 = vadd.xlane.f32.xlu0 %v215
        %v217 = vpop.xlane.xlu0 %216
        %v218 = vmax.f32 %v217, 1e-24
        %v219 = vrsqrt.pop %v218
        %v220 = vmul.f32 %v219, %v218
        %v221 = vmul.f32 %v220, %v219
        %v222 = vmul.f32 0.5, %v221
        %v223 = vsub.f32 1.5, %v222
        %v224 = vmul.f32 %v219, %v223
        %vm225 = vweird.f32 %v218
        %vm226 = vweird.f32 %v219
        %vm227 = vmor %vm225, %vm226
        %v228 = vsel %vm227, %v219, %v224
        %v229 = vmul.f32 %v183, %v228
        %v230 = vmul.f32 %v184, %v184
        %v231 = vmul.f32 %v185, %v185
        %v232 = vmul.f32 %v186, %v186
        %v233 = vmul.f32 %v187, %v187
        %v234 = vmul.f32 %v188, %v188
        %v235 = vmul.f32 %v189, %v189
        %v236 = vmul.f32 %v190, %v190
        %v237 = vmul.f32 %v191, %v191
        %v238 = vmul.f32 %v192, %v192
        %v239 = vmul.f32 %v193, %v193
        %v240 = vmul.f32 %v194, %v194
        %v241 = vmul.f32 %v195, %v195
        %v242 = vmul.f32 %v196, %v196
        %v243 = vmul.f32 %v197, %v197
        %v244 = vmul.f32 %v198, %v198
        %v245 = vmul.f32 %v199, %v199
        %v246 = vmul.f32 %v200, %v200
        %v247 = vmul.f32 %v201, %v201
        %v248 = vmul.f32 %v202, %v202
        %v249 = vmul.f32 %v203, %v203
        %v250 = vmul.f32 %v204, %v204
        %v251 = vmul.f32 %v205, %v205
        %v252 = vmul.f32 %v206, %v206
        %v253 = vmul.f32 %v207, %v207
        %v254 = vmul.f32 %v208, %v208
        %v255 = vmul.f32 %v209, %v209
        %v256 = vmul.f32 %v210, %v210
        %v257 = vmul.f32 %v211, %v211
        %v258 = vmul.f32 %v212, %v212
        %v259 = vmul.f32 %v213, %v213
        %v260 = vmul.f32 %v214, %v214
        %261 = vadd.xlane.f32.xlu0 %v230
        %v262 = vpop.xlane.xlu0 %261
        %263 = vadd.xlane.f32.xlu0 %v231
        %v264 = vpop.xlane.xlu0 %263
        %265 = vadd.xlane.f32.xlu0 %v232
        %v266 = vpop.xlane.xlu0 %265
        %267 = vadd.xlane.f32.xlu0 %v233
        %v268 = vpop.xlane.xlu0 %267
        %269 = vadd.xlane.f32.xlu0 %v234
        %v270 = vpop.xlane.xlu0 %269
        %271 = vadd.xlane.f32.xlu0 %v235
        %v272 = vpop.xlane.xlu0 %271
        %273 = vadd.xlane.f32.xlu0 %v236
        %v274 = vpop.xlane.xlu0 %273
        %275 = vadd.xlane.f32.xlu0 %v237
        %v276 = vpop.xlane.xlu0 %275
        %277 = vadd.xlane.f32.xlu0 %v238
        %v278 = vpop.xlane.xlu0 %277
        %279 = vadd.xlane.f32.xlu0 %v239
        %v280 = vpop.xlane.xlu0 %279
        %281 = vadd.xlane.f32.xlu0 %v240
        %v282 = vpop.xlane.xlu0 %281
        %283 = vadd.xlane.f32.xlu0 %v241
        %v284 = vpop.xlane.xlu0 %283
        %285 = vadd.xlane.f32.xlu0 %v242
        %v286 = vpop.xlane.xlu0 %285
        %287 = vadd.xlane.f32.xlu0 %v243
        %v288 = vpop.xlane.xlu0 %287
        %289 = vadd.xlane.f32.xlu0 %v244
        %v290 = vpop.xlane.xlu0 %289
        %291 = vadd.xlane.f32.xlu0 %v245
        %v292 = vpop.xlane.xlu0 %291
        %293 = vadd.xlane.f32.xlu0 %v246
        %v294 = vpop.xlane.xlu0 %293
        %295 = vadd.xlane.f32.xlu0 %v247
        %v296 = vpop.xlane.xlu0 %295
        %297 = vadd.xlane.f32.xlu0 %v248
        %v298 = vpop.xlane.xlu0 %297
        %299 = vadd.xlane.f32.xlu0 %v249
        %v300 = vpop.xlane.xlu0 %299
        %301 = vadd.xlane.f32.xlu0 %v250
        %v302 = vpop.xlane.xlu0 %301
        %303 = vadd.xlane.f32.xlu0 %v251
        %v304 = vpop.xlane.xlu0 %303
        %305 = vadd.xlane.f32.xlu0 %v252
        %v306 = vpop.xlane.xlu0 %305
        %307 = vadd.xlane.f32.xlu0 %v253
        %v308 = vpop.xlane.xlu0 %307
        %309 = vadd.xlane.f32.xlu0 %v254
        %v310 = vpop.xlane.xlu0 %309
        %311 = vadd.xlane.f32.xlu0 %v255
        %v312 = vpop.xlane.xlu0 %311
        %313 = vadd.xlane.f32.xlu0 %v256
        %v314 = vpop.xlane.xlu0 %313
        %315 = vadd.xlane.f32.xlu0 %v257
        %v316 = vpop.xlane.xlu0 %315
        %317 = vadd.xlane.f32.xlu0 %v258
        %v318 = vpop.xlane.xlu0 %317
        %319 = vadd.xlane.f32.xlu0 %v259
        %v320 = vpop.xlane.xlu0 %319
        %321 = vadd.xlane.f32.xlu0 %v260
        %v322 = vpop.xlane.xlu0 %321
        %v323 = vmax.f32 %v262, 1e-24
        %v324 = vmax.f32 %v264, 1e-24
        %v325 = vmax.f32 %v266, 1e-24
        %v326 = vmax.f32 %v268, 1e-24
        %v327 = vmax.f32 %v270, 1e-24
        %v328 = vmax.f32 %v272, 1e-24
        %v329 = vmax.f32 %v274, 1e-24
        %v330 = vmax.f32 %v276, 1e-24
        %v331 = vmax.f32 %v278, 1e-24
        %v332 = vmax.f32 %v280, 1e-24
        %v333 = vmax.f32 %v282, 1e-24
        %v334 = vmax.f32 %v284, 1e-24
        %v335 = vmax.f32 %v286, 1e-24
        %v336 = vmax.f32 %v288, 1e-24
        %v337 = vmax.f32 %v290, 1e-24
        %v338 = vmax.f32 %v292, 1e-24
        %v339 = vmax.f32 %v294, 1e-24
        %v340 = vmax.f32 %v296, 1e-24
        %v341 = vmax.f32 %v298, 1e-24
        %v342 = vmax.f32 %v300, 1e-24
        %v343 = vmax.f32 %v302, 1e-24
        %v344 = vmax.f32 %v304, 1e-24
        %v345 = vmax.f32 %v306, 1e-24
        %v346 = vmax.f32 %v308, 1e-24
        %v347 = vmax.f32 %v310, 1e-24
        %v348 = vmax.f32 %v312, 1e-24
        %v349 = vmax.f32 %v314, 1e-24
        %v350 = vmax.f32 %v316, 1e-24
        %v351 = vmax.f32 %v318, 1e-24
        %v352 = vmax.f32 %v320, 1e-24
        %v353 = vmax.f32 %v322, 1e-24
        %v354 = vrsqrt.pop %v323
        %v355 = vmul.f32 %v354, %v323
        %v356 = vmul.f32 %v355, %v354
        %v357 = vmul.f32 0.5, %v356
        %v358 = vsub.f32 1.5, %v357
        %v359 = vmul.f32 %v354, %v358
        %vm360 = vweird.f32 %v323
        %vm361 = vweird.f32 %v354
        %vm362 = vmor %vm360, %vm361
        %v363 = vsel %vm362, %v354, %v359
        %v364 = vrsqrt.pop %v324
        %v365 = vmul.f32 %v364, %v324
        %v366 = vmul.f32 %v365, %v364
        %v367 = vmul.f32 0.5, %v366
        %v368 = vsub.f32 1.5, %v367
        %v369 = vmul.f32 %v364, %v368
        %vm370 = vweird.f32 %v324
        %vm371 = vweird.f32 %v364
        %vm372 = vmor %vm370, %vm371
        %v373 = vsel %vm372, %v364, %v369
        %v374 = vrsqrt.pop %v325
        %v375 = vmul.f32 %v374, %v325
        %v376 = vmul.f32 %v375, %v374
        %v377 = vmul.f32 0.5, %v376
        %v378 = vsub.f32 1.5, %v377
        %v379 = vmul.f32 %v374, %v378
        %vm380 = vweird.f32 %v325
        %vm381 = vweird.f32 %v374
        %vm382 = vmor %vm380, %vm381
        %v383 = vsel %vm382, %v374, %v379
        %v384 = vrsqrt.pop %v326
        %v385 = vmul.f32 %v384, %v326
        %v386 = vmul.f32 %v385, %v384
        %v387 = vmul.f32 0.5, %v386
        %v388 = vsub.f32 1.5, %v387
        %v389 = vmul.f32 %v384, %v388
        %vm390 = vweird.f32 %v326
        %vm391 = vweird.f32 %v384
        %vm392 = vmor %vm390, %vm391
        %v393 = vsel %vm392, %v384, %v389
        %v394 = vrsqrt.pop %v327
        %v395 = vmul.f32 %v394, %v327
        %v396 = vmul.f32 %v395, %v394
        %v397 = vmul.f32 0.5, %v396
        %v398 = vsub.f32 1.5, %v397
        %v399 = vmul.f32 %v394, %v398
        %vm400 = vweird.f32 %v327
        %vm401 = vweird.f32 %v394
        %vm402 = vmor %vm400, %vm401
        %v403 = vsel %vm402, %v394, %v399
        %v404 = vrsqrt.pop %v328
        %v405 = vmul.f32 %v404, %v328
        %v406 = vmul.f32 %v405, %v404
        %v407 = vmul.f32 0.5, %v406
        %v408 = vsub.f32 1.5, %v407
        %v409 = vmul.f32 %v404, %v408
        %vm410 = vweird.f32 %v328
        %vm411 = vweird.f32 %v404
        %vm412 = vmor %vm410, %vm411
        %v413 = vsel %vm412, %v404, %v409
        %v414 = vrsqrt.pop %v329
        %v415 = vmul.f32 %v414, %v329
        %v416 = vmul.f32 %v415, %v414
        %v417 = vmul.f32 0.5, %v416
        %v418 = vsub.f32 1.5, %v417
        %v419 = vmul.f32 %v414, %v418
        %vm420 = vweird.f32 %v329
        %vm421 = vweird.f32 %v414
        %vm422 = vmor %vm420, %vm421
        %v423 = vsel %vm422, %v414, %v419
        %v424 = vrsqrt.pop %v330
        %v425 = vmul.f32 %v424, %v330
        %v426 = vmul.f32 %v425, %v424
        %v427 = vmul.f32 0.5, %v426
        %v428 = vsub.f32 1.5, %v427
        %v429 = vmul.f32 %v424, %v428
        %vm430 = vweird.f32 %v330
        %vm431 = vweird.f32 %v424
        %vm432 = vmor %vm430, %vm431
        %v433 = vsel %vm432, %v424, %v429
        %v434 = vrsqrt.pop %v331
        %v435 = vmul.f32 %v434, %v331
        %v436 = vmul.f32 %v435, %v434
        %v437 = vmul.f32 0.5, %v436
        %v438 = vsub.f32 1.5, %v437
        %v439 = vmul.f32 %v434, %v438
        %vm440 = vweird.f32 %v331
        %vm441 = vweird.f32 %v434
        %vm442 = vmor %vm440, %vm441
        %v443 = vsel %vm442, %v434, %v439
        %v444 = vrsqrt.pop %v332
        %v445 = vmul.f32 %v444, %v332
        %v446 = vmul.f32 %v445, %v444
        %v447 = vmul.f32 0.5, %v446
        %v448 = vsub.f32 1.5, %v447
        %v449 = vmul.f32 %v444, %v448
        %vm450 = vweird.f32 %v332
        %vm451 = vweird.f32 %v444
        %vm452 = vmor %vm450, %vm451
        %v453 = vsel %vm452, %v444, %v449
        %v454 = vrsqrt.pop %v333
        %v455 = vmul.f32 %v454, %v333
        %v456 = vmul.f32 %v455, %v454
        %v457 = vmul.f32 0.5, %v456
        %v458 = vsub.f32 1.5, %v457
        %v459 = vmul.f32 %v454, %v458
        %vm460 = vweird.f32 %v333
        %vm461 = vweird.f32 %v454
        %vm462 = vmor %vm460, %vm461
        %v463 = vsel %vm462, %v454, %v459
        %v464 = vrsqrt.pop %v334
        %v465 = vmul.f32 %v464, %v334
        %v466 = vmul.f32 %v465, %v464
        %v467 = vmul.f32 0.5, %v466
        %v468 = vsub.f32 1.5, %v467
        %v469 = vmul.f32 %v464, %v468
        %vm470 = vweird.f32 %v334
        %vm471 = vweird.f32 %v464
        %vm472 = vmor %vm470, %vm471
        %v473 = vsel %vm472, %v464, %v469
        %v474 = vrsqrt.pop %v335
        %v475 = vmul.f32 %v474, %v335
        %v476 = vmul.f32 %v475, %v474
        %v477 = vmul.f32 0.5, %v476
        %v478 = vsub.f32 1.5, %v477
        %v479 = vmul.f32 %v474, %v478
        %vm480 = vweird.f32 %v335
        %vm481 = vweird.f32 %v474
        %vm482 = vmor %vm480, %vm481
        %v483 = vsel %vm482, %v474, %v479
        %v484 = vrsqrt.pop %v336
        %v485 = vmul.f32 %v484, %v336
        %v486 = vmul.f32 %v485, %v484
        %v487 = vmul.f32 0.5, %v486
        %v488 = vsub.f32 1.5, %v487
        %v489 = vmul.f32 %v484, %v488
        %vm490 = vweird.f32 %v336
        %vm491 = vweird.f32 %v484
        %vm492 = vmor %vm490, %vm491
        %v493 = vsel %vm492, %v484, %v489
        %v494 = vrsqrt.pop %v337
        %v495 = vmul.f32 %v494, %v337
        %v496 = vmul.f32 %v495, %v494
        %v497 = vmul.f32 0.5, %v496
        %v498 = vsub.f32 1.5, %v497
        %v499 = vmul.f32 %v494, %v498
        %vm500 = vweird.f32 %v337
        %vm501 = vweird.f32 %v494
        %vm502 = vmor %vm500, %vm501
        %v503 = vsel %vm502, %v494, %v499
        %v504 = vrsqrt.pop %v338
        %v505 = vmul.f32 %v504, %v338
        %v506 = vmul.f32 %v505, %v504
        %v507 = vmul.f32 0.5, %v506
        %v508 = vsub.f32 1.5, %v507
        %v509 = vmul.f32 %v504, %v508
        %vm510 = vweird.f32 %v338
        %vm511 = vweird.f32 %v504
        %vm512 = vmor %vm510, %vm511
        %v513 = vsel %vm512, %v504, %v509
        %v514 = vrsqrt.pop %v339
        %v515 = vmul.f32 %v514, %v339
        %v516 = vmul.f32 %v515, %v514
        %v517 = vmul.f32 0.5, %v516
        %v518 = vsub.f32 1.5, %v517
        %v519 = vmul.f32 %v514, %v518
        %vm520 = vweird.f32 %v339
        %vm521 = vweird.f32 %v514
        %vm522 = vmor %vm520, %vm521
        %v523 = vsel %vm522, %v514, %v519
        %v524 = vrsqrt.pop %v340
        %v525 = vmul.f32 %v524, %v340
        %v526 = vmul.f32 %v525, %v524
        %v527 = vmul.f32 0.5, %v526
        %v528 = vsub.f32 1.5, %v527
        %v529 = vmul.f32 %v524, %v528
        %vm530 = vweird.f32 %v340
        %vm531 = vweird.f32 %v524
        %vm532 = vmor %vm530, %vm531
        %v533 = vsel %vm532, %v524, %v529
        %v534 = vrsqrt.pop %v341
        %v535 = vmul.f32 %v534, %v341
        %v536 = vmul.f32 %v535, %v534
        %v537 = vmul.f32 0.5, %v536
        %v538 = vsub.f32 1.5, %v537
        %v539 = vmul.f32 %v534, %v538
        %vm540 = vweird.f32 %v341
        %vm541 = vweird.f32 %v534
        %vm542 = vmor %vm540, %vm541
        %v543 = vsel %vm542, %v534, %v539
        %v544 = vrsqrt.pop %v342
        %v545 = vmul.f32 %v544, %v342
        %v546 = vmul.f32 %v545, %v544
        %v547 = vmul.f32 0.5, %v546
        %v548 = vsub.f32 1.5, %v547
        %v549 = vmul.f32 %v544, %v548
        %vm550 = vweird.f32 %v342
        %vm551 = vweird.f32 %v544
        %vm552 = vmor %vm550, %vm551
        %v553 = vsel %vm552, %v544, %v549
        %v554 = vrsqrt.pop %v343
        %v555 = vmul.f32 %v554, %v343
        %v556 = vmul.f32 %v555, %v554
        %v557 = vmul.f32 0.5, %v556
        %v558 = vsub.f32 1.5, %v557
        %v559 = vmul.f32 %v554, %v558
        %vm560 = vweird.f32 %v343
        %vm561 = vweird.f32 %v554
        %vm562 = vmor %vm560, %vm561
        %v563 = vsel %vm562, %v554, %v559
        %v564 = vrsqrt.pop %v344
        %v565 = vmul.f32 %v564, %v344
        %v566 = vmul.f32 %v565, %v564
        %v567 = vmul.f32 0.5, %v566
        %v568 = vsub.f32 1.5, %v567
        %v569 = vmul.f32 %v564, %v568
        %vm570 = vweird.f32 %v344
        %vm571 = vweird.f32 %v564
        %vm572 = vmor %vm570, %vm571
        %v573 = vsel %vm572, %v564, %v569
        %v574 = vrsqrt.pop %v345
        %v575 = vmul.f32 %v574, %v345
        %v576 = vmul.f32 %v575, %v574
        %v577 = vmul.f32 0.5, %v576
        %v578 = vsub.f32 1.5, %v577
        %v579 = vmul.f32 %v574, %v578
        %vm580 = vweird.f32 %v345
        %vm581 = vweird.f32 %v574
        %vm582 = vmor %vm580, %vm581
        %v583 = vsel %vm582, %v574, %v579
        %v584 = vrsqrt.pop %v346
        %v585 = vmul.f32 %v584, %v346
        %v586 = vmul.f32 %v585, %v584
        %v587 = vmul.f32 0.5, %v586
        %v588 = vsub.f32 1.5, %v587
        %v589 = vmul.f32 %v584, %v588
        %vm590 = vweird.f32 %v346
        %vm591 = vweird.f32 %v584
        %vm592 = vmor %vm590, %vm591
        %v593 = vsel %vm592, %v584, %v589
        %v594 = vrsqrt.pop %v347
        %v595 = vmul.f32 %v594, %v347
        %v596 = vmul.f32 %v595, %v594
        %v597 = vmul.f32 0.5, %v596
        %v598 = vsub.f32 1.5, %v597
        %v599 = vmul.f32 %v594, %v598
        %vm600 = vweird.f32 %v347
        %vm601 = vweird.f32 %v594
        %vm602 = vmor %vm600, %vm601
        %v603 = vsel %vm602, %v594, %v599
        %v604 = vrsqrt.pop %v348
        %v605 = vmul.f32 %v604, %v348
        %v606 = vmul.f32 %v605, %v604
        %v607 = vmul.f32 0.5, %v606
        %v608 = vsub.f32 1.5, %v607
        %v609 = vmul.f32 %v604, %v608
        %vm610 = vweird.f32 %v348
        %vm611 = vweird.f32 %v604
        %vm612 = vmor %vm610, %vm611
        %v613 = vsel %vm612, %v604, %v609
        %v614 = vrsqrt.pop %v349
        %v615 = vmul.f32 %v614, %v349
        %v616 = vmul.f32 %v615, %v614
        %v617 = vmul.f32 0.5, %v616
        %v618 = vsub.f32 1.5, %v617
        %v619 = vmul.f32 %v614, %v618
        %vm620 = vweird.f32 %v349
        %vm621 = vweird.f32 %v614
        %vm622 = vmor %vm620, %vm621
        %v623 = vsel %vm622, %v614, %v619
        %v624 = vrsqrt.pop %v350
        %v625 = vmul.f32 %v624, %v350
        %v626 = vmul.f32 %v625, %v624
        %v627 = vmul.f32 0.5, %v626
        %v628 = vsub.f32 1.5, %v627
        %v629 = vmul.f32 %v624, %v628
        %vm630 = vweird.f32 %v350
        %vm631 = vweird.f32 %v624
        %vm632 = vmor %vm630, %vm631
        %v633 = vsel %vm632, %v624, %v629
        %v634 = vrsqrt.pop %v351
        %v635 = vmul.f32 %v634, %v351
        %v636 = vmul.f32 %v635, %v634
        %v637 = vmul.f32 0.5, %v636
        %v638 = vsub.f32 1.5, %v637
        %v639 = vmul.f32 %v634, %v638
        %vm640 = vweird.f32 %v351
        %vm641 = vweird.f32 %v634
        %vm642 = vmor %vm640, %vm641
        %v643 = vsel %vm642, %v634, %v639
        %v644 = vrsqrt.pop %v352
        %v645 = vmul.f32 %v644, %v352
        %v646 = vmul.f32 %v645, %v644
        %v647 = vmul.f32 0.5, %v646
        %v648 = vsub.f32 1.5, %v647
        %v649 = vmul.f32 %v644, %v648
        %vm650 = vweird.f32 %v352
        %vm651 = vweird.f32 %v644
        %vm652 = vmor %vm650, %vm651
        %v653 = vsel %vm652, %v644, %v649
        %v654 = vrsqrt.pop %v353
        %v655 = vmul.f32 %v654, %v353
        %v656 = vmul.f32 %v655, %v654
        %v657 = vmul.f32 0.5, %v656
        %v658 = vsub.f32 1.5, %v657
        %v659 = vmul.f32 %v654, %v658
        %vm660 = vweird.f32 %v353
        %vm661 = vweird.f32 %v654
        %vm662 = vmor %vm660, %vm661
        %v663 = vsel %vm662, %v654, %v659
        %v664 = vmul.f32 %v184, %v363
        %v665 = vmul.f32 %v185, %v373
        %v666 = vmul.f32 %v186, %v383
        %v667 = vmul.f32 %v187, %v393
        %v668 = vmul.f32 %v188, %v403
        %v669 = vmul.f32 %v189, %v413
        %v670 = vmul.f32 %v190, %v423
        %v671 = vmul.f32 %v191, %v433
        %v672 = vmul.f32 %v192, %v443
        %v673 = vmul.f32 %v193, %v453
        %v674 = vmul.f32 %v194, %v463
        %v675 = vmul.f32 %v195, %v473
        %v676 = vmul.f32 %v196, %v483
        %v677 = vmul.f32 %v197, %v493
        %v678 = vmul.f32 %v198, %v503
        %v679 = vmul.f32 %v199, %v513
        %v680 = vmul.f32 %v200, %v523
        %v681 = vmul.f32 %v201, %v533
        %v682 = vmul.f32 %v202, %v543
        %v683 = vmul.f32 %v203, %v553
        %v684 = vmul.f32 %v204, %v563
        %v685 = vmul.f32 %v205, %v573
        %v686 = vmul.f32 %v206, %v583
        %v687 = vmul.f32 %v207, %v593
        %v688 = vmul.f32 %v208, %v603
        %v689 = vmul.f32 %v209, %v613
        %v690 = vmul.f32 %v210, %v623
        %v691 = vmul.f32 %v211, %v633
        %v692 = vmul.f32 %v212, %v643
        %v693 = vmul.f32 %v213, %v653
        %v694 = vmul.f32 %v214, %v663
        %695 = vst [vmem:[%s176] sm:$0xff] %v229
        %696 = vst [vmem:[%s176 + $0x8] sm:$0xff] %v664
        %697 = vst [vmem:[%s176 + $0x10] sm:$0xff] %v665
        %698 = vst [vmem:[%s176 + $0x18] sm:$0xff] %v666
        %699 = vst [vmem:[%s176 + $0x20] sm:$0xff] %v667
        %700 = vst [vmem:[%s176 + $0x28] sm:$0xff] %v668
        %701 = vst [vmem:[%s176 + $0x30] sm:$0xff] %v669
        %702 = vst [vmem:[%s176 + $0x38] sm:$0xff] %v670
        %703 = vst [vmem:[%s176 + $0x40] sm:$0xff] %v671
        %704 = vst [vmem:[%s176 + $0x48] sm:$0xff] %v672
        %705 = vst [vmem:[%s176 + $0x50] sm:$0xff] %v673
        %706 = vst [vmem:[%s176 + $0x58] sm:$0xff] %v674
        %707 = vst [vmem:[%s176 + $0x60] sm:$0xff] %v675
        %708 = vst [vmem:[%s176 + $0x68] sm:$0xff] %v676
        %709 = vst [vmem:[%s176 + $0x70] sm:$0xff] %v677
        %710 = vst [vmem:[%s176 + $0x78] sm:$0xff] %v678
        %711 = vst [vmem:[%s176 + $0x80] sm:$0xff] %v679
        %712 = vst [vmem:[%s176 + $0x88] sm:$0xff] %v680
        %713 = vst [vmem:[%s176 + $0x90] sm:$0xff] %v681
        %714 = vst [vmem:[%s176 + $0x98] sm:$0xff] %v682
        %715 = vst [vmem:[%s176 + $0xa0] sm:$0xff] %v683
        %716 = vst [vmem:[%s176 + $0xa8] sm:$0xff] %v684
        %717 = vst [vmem:[%s176 + $0xb0] sm:$0xff] %v685
        %718 = vst [vmem:[%s176 + $0xb8] sm:$0xff] %v686
        %719 = vst [vmem:[%s176 + $0xc0] sm:$0xff] %v687
        %720 = vst [vmem:[%s176 + $0xc8] sm:$0xff] %v688
        %721 = vst [vmem:[%s176 + $0xd0] sm:$0xff] %v689
        %722 = vst [vmem:[%s176 + $0xd8] sm:$0xff] %v690
        %723 = vst [vmem:[%s176 + $0xe0] sm:$0xff] %v691
        %724 = vst [vmem:[%s176 + $0xe8] sm:$0xff] %v692
        %725 = vst [vmem:[%s176 + $0xf0] sm:$0xff] %v693
        %726 = vst [vmem:[%s176 + $0xf8] sm:$0xff] %v694
        %s727 = sand.u32 %s79, 1
        %s728 = scalar_lea.sflag [#allocation4], %s727
        %s729 = sand.u32 %s79, 1
        %s730 = smul.addr %s729, 256
        %s731 = scalar_lea.vmem [#allocation5], %s730
        // Predicated region
        $region33: #{tpu_custom_call.1} parent=27 // pred_check
          %p732 = pneg %p89
        $region34: #{tpu_custom_call.1} parent=27 // pred_check_branch
          %734 = sbr.rel (%p732) target = $region36
        $region35: #{tpu_custom_call.1} parent=27 // pred_region
          %s735 = smul.u32 32, %s19
          %737 = vsyncadd %s728, 0
          %s738 = smul.addr %s735, 8
          %s739 = scalar_lea.hbm %s2, %s738
          %s740 = sshll.u32 %s731, 4
          %s741 = int_to_ptr.vmem [resolvable:$true] %s740
          %s742 = sshll.u32 %s739, 4
          %s743 = int_to_ptr.hbm [resolvable:$true] %s742
          %748 = dma.vmem_to_hbm [thread:$0]  %s741, 4096, %s743, %s728, 128, 128, 8
        $region36: #{tpu_custom_call.1} parent=27 // pred_fallthru
          _
      $region28: #{tpu_custom_call.1} parent=5 // pred_fallthru
        _
      %p749 = scmp.le.s32.totalorder 2, %s14
      // Predicated region
      $region37: #{tpu_custom_call.1} parent=5 // pred_check
        %p750 = pneg %p749
      $region38: #{tpu_custom_call.1} parent=5 // pred_check_branch
        %752 = sbr.rel (%p750) target = $region40
      $region39: #{tpu_custom_call.1} parent=5 // pred_region
        %s753 = ssub.s32 %s14, 2
        // Predicated region
        $region41: #{tpu_custom_call.1} parent=39 // pred_check
          %p754 = pneg %p95
        $region42: #{tpu_custom_call.1} parent=39 // pred_check_branch
          %756 = sbr.rel (%p754) target = $region44
        $region43: #{tpu_custom_call.1} parent=39 // pred_region
          %s757 = sand.u32 %s80, 1
          %s758 = scalar_lea.sflag [#allocation4], %s757
          %s759 = sand.u32 %s80, 1
          %s760 = smul.addr %s759, 256
          %s761 = scalar_lea.vmem [#allocation5], %s760
          %763 = dma.done %s758, 4096
        $region44: #{tpu_custom_call.1} parent=39 // pred_fallthru
          _
      $region40: #{tpu_custom_call.1} parent=5 // pred_fallthru
        _
    $region6: #{tpu_custom_call.1} parent=1 // loop_footer
      %s18 = sadd.s32 1, %s14
    $region7: #{tpu_custom_call.1} parent=1 // loop_footer_branch
      %13 = sbr.rel target = $region3
    $region8: #{tpu_custom_call.1} parent=1 // loop_exit
      _
    %764 = vsyncpa [#allocation3], 1
    %s765 = scalar_lea.sflag [#allocation3], 1
    %766 = vsyncpa %s765, 1
    %767 = vsyncpa [#allocation4], 1
    %s768 = scalar_lea.sflag [#allocation4], 1
    %769 = vsyncpa %s768, 1

</llo_original>
